<compile_context>
chip_gen: v5e
topology: v5e:2x2
jax: 0.10.0
libtpu: 0.0.40
codegen_flags: <defaults>
</compile_context>

<pallas_src>
import jax
import jax.numpy as jnp
from jax.experimental import pallas as pl
from jax.experimental.pallas import tpu as pltpu


def _round_up(x: int, m: int) -> int:
    return (x + m - 1) // m * m


# -----------------------------------------------------------------------------
# Kernel 1: VMEM-resident M^T.  grid = (K,); every block index is constant, so
# each operand is DMA'd exactly once and the K diffusion steps are back-to-back
# MXU matmuls on VMEM-resident data.
# -----------------------------------------------------------------------------
def _dgc_resident_kernel(y0_ref, mT_ref, o_ref, y_buf):
    s = pl.program_id(0)
    last = pl.num_programs(0) - 1
    src = s % 2                      # ping-pong buffer holding yT after s steps
    dst = 1 - src

    @pl.when(s == 0)
    def _():
        y_buf[0] = y0_ref[...].astype(jnp.float32)

    # yT_{s+1} = yT_s @ M^T   (features on sublanes, nodes on lanes)
    y_buf[dst] = jnp.dot(y_buf[src].astype(mT_ref.dtype), mT_ref[...],
                         preferred_element_type=jnp.float32)

    @pl.when(s == last)
    def _():
        o_ref[...] = y_buf[dst].astype(o_ref.dtype)


# -----------------------------------------------------------------------------
# Kernel 2: streamed M^T tiles for graphs whose operator does not fit VMEM.
# grid = (diffusion step s, output node-tile j, contraction node-tile k).
# y_buf: VMEM scratch (2*NB, F_out_pad, T) -- two ping-pong copies of yT, blocked
# along the node axis (slot = buffer * NB + node_block) so all dynamic indexing
# stays on the leading (untiled) dim.
# -----------------------------------------------------------------------------
def _dgc_tiled_kernel(y0_ref, mT_ref, o_ref, y_buf):
    s = pl.program_id(0)
    j = pl.program_id(1)
    k = pl.program_id(2)
    nk = pl.num_programs(2)          # == NB (node blocks)
    last = pl.num_programs(0) - 1

    src = s % 2                      # buffer holding yT of step s
    dst = 1 - src                    # buffer receiving yT of step s+1

    # Prime the ping-pong buffer with y0T (hoisted x @ W), once per k-block during
    # the first (s=0, j=0) sweep over k.  y0's index_map only moves during that
    # sweep, so there are no dead y0 DMAs on later steps.
    @pl.when(jnp.logical_and(s == 0, j == 0))
    def _():
        y_buf[k] = y0_ref[...].astype(jnp.float32)

    # Partial product for node-tile j of step s+1:
    #   yT_{s+1}[:, j_blk] += yT_s[:, k_blk] @ M^T[k_blk, j_blk]
    y_src = y_buf[src * nk + k].astype(mT_ref.dtype)
    partial = jnp.dot(y_src, mT_ref[...], preferred_element_type=jnp.float32)

    @pl.when(k == 0)
    def _():
        y_buf[dst * nk + j] = partial

    @pl.when(k != 0)
    def _():
        y_buf[dst * nk + j] += partial

    # Emit only after the FINAL diffusion step's k-reduction completes.  Earlier-step
    # writebacks of this (small, F_out-wide) output tile carry don't-care data and are
    # overwritten; the grid is strictly sequential (all axes 'arbitrary'), so the last
    # write wins.
    @pl.when(jnp.logical_and(s == last, k == nk - 1))
    def _():
        o_ref[...] = y_buf[dst * nk + j].astype(o_ref.dtype)


def dgc_forward(x, a_norm, weight, bias, *, K: int = 5, t: float = 5.27,
                node_tile: int = 1024, m_dtype=jnp.float32,
                a_norm_symmetric: bool = True,
                resident_vmem_budget: int = 40 * 1024 * 1024,
                force_tiled: bool = False):
    """Fused DGC forward: out = M^K (x @ W) + b, with M = (1-delta) I + delta A_norm."""
    N, F_in = x.shape
    F_out = weight.shape[1]

    # ---- plain-JAX glue ---------------------------------------------------------
    # Dense layer hoisted in front of the (linear) diffusion: tiny (N,F_in)x(F_in,F_out).
    y0 = jnp.dot(x.astype(jnp.float32), weight.astype(jnp.float32))
    bias_row = bias.reshape(1, -1).astype(jnp.float32)
    if K <= 0:
        return y0 + bias_row

    delta = t / K
    cdt = jnp.dtype(m_dtype)

    F_out_pad = _round_up(F_out, 8)
    N_pad128 = _round_up(N, 128)

    # Residency feasibility (conservative: assume M^T is double-buffered anyway).
    m_bytes = N_pad128 * N_pad128 * cdt.itemsize
    small_bytes = 6 * F_out_pad * N_pad128 * 4           # y_buf(2) + y0(2) + out(2)
    resident = (not force_tiled) and (2 * m_bytes + small_bytes <= resident_vmem_budget)

    if resident:
        T = N_pad = N_pad128
        NB = 1
    else:
        T = max(128, min(_round_up(node_tile, 128), 2048, N_pad128))
        N_pad = _round_up(N, T)
        NB = N_pad // T

    # Folded diffusion operator, transposed for the lane-dense yT @ M^T formulation.
    # gcn_norm's symmetric normalization of an undirected graph is symmetric (M^T == M);
    # pass a_norm_symmetric=False for directed graphs (adds one transpose).
    a_src = a_norm if a_norm_symmetric else a_norm.T
    mT = jnp.zeros((N_pad, N_pad), cdt).at[:N, :N].set((delta * a_src).astype(cdt))
    diag = jnp.arange(N)
    mT = mT.at[diag, diag].add(jnp.asarray(1.0 - delta, cdt))

    y0T = jnp.zeros((F_out_pad, N_pad), jnp.float32).at[:F_out, :N].set(y0.T)

    flops = 2 * K * F_out_pad * N_pad * N_pad

    if resident:
        bytes_accessed = m_bytes + 2 * F_out_pad * N_pad * 4        # M^T once, y0 + out once
        vmem_limit = int(max(2 * m_bytes + small_bytes + (4 << 20), 32 << 20))
        oT = pl.pallas_call(
            _dgc_resident_kernel,
            out_shape=jax.ShapeDtypeStruct((F_out_pad, N_pad), jnp.float32),
            grid_spec=pltpu.PrefetchScalarGridSpec(
                num_scalar_prefetch=0,
                grid=(K,),
                in_specs=[
                    pl.BlockSpec((F_out_pad, N_pad), lambda s: (0, 0)),   # y0T, DMA'd once
                    pl.BlockSpec((N_pad, N_pad), lambda s: (0, 0)),       # M^T, DMA'd once
                ],
                out_specs=pl.BlockSpec((F_out_pad, N_pad), lambda s: (0, 0)),
                scratch_shapes=[pltpu.VMEM((2, F_out_pad, N_pad), jnp.float32)],
            ),
            compiler_params=pltpu.CompilerParams(
                dimension_semantics=("arbitrary",),      # sequential ping-pong carry
                vmem_limit_bytes=vmem_limit,
            ),
            cost_estimate=pl.CostEstimate(
                flops=int(flops), transcendentals=0, bytes_accessed=int(bytes_accessed)),
        )(y0T, mT)
    else:
        # M^T streamed K times; y0 fetched ~NB times (step 0 only); output tile written
        # back once per step (small: F_out << N).
        bytes_accessed = (K * N_pad * N_pad * cdt.itemsize
                          + (NB + 2) * F_out_pad * T * 4
                          + K * F_out_pad * N_pad * 4)
        tile_bytes = (2 * T * T * cdt.itemsize           # M^T double buffer
                      + 2 * NB * F_out_pad * T * 4       # yT ping-pong scratch
                      + 4 * F_out_pad * T * 4)           # y0 + out double buffers
        vmem_limit = int(min(max(tile_bytes + (8 << 20), 32 << 20), 64 << 20))

        def _y0_index_map(s, j, k):
            # Only walk the y0 blocks during the (s=0, j=0) priming sweep; afterwards the
            # block index is constant so Pallas stops re-DMA'ing it.
            first = jnp.logical_and(s == 0, j == 0)
            return 0, jnp.where(first, k, 0)

        oT = pl.pallas_call(
            _dgc_tiled_kernel,
            out_shape=jax.ShapeDtypeStruct((F_out_pad, N_pad), jnp.float32),
            grid_spec=pltpu.PrefetchScalarGridSpec(
                num_scalar_prefetch=0,
                grid=(K, NB, NB),     # (diffusion step, output tile j, contraction tile k)
                in_specs=[
                    pl.BlockSpec((F_out_pad, T), _y0_index_map),           # y0T (step 0 only)
                    pl.BlockSpec((T, T), lambda s, j, k: (k, j)),          # M^T tile stream
                ],
                out_specs=pl.BlockSpec((F_out_pad, T), lambda s, j, k: (0, j)),
                scratch_shapes=[pltpu.VMEM((2 * NB, F_out_pad, T), jnp.float32)],
            ),
            compiler_params=pltpu.CompilerParams(
                # All axes carry dependencies through the ping-pong scratch / k-reduction:
                # none may be split across TensorCores in this single-call design.
                dimension_semantics=("arbitrary", "arbitrary", "arbitrary"),
                vmem_limit_bytes=vmem_limit,
            ),
            cost_estimate=pl.CostEstimate(
                flops=int(flops), transcendentals=0, bytes_accessed=int(bytes_accessed)),
        )(y0T, mT)

    return oT[:F_out, :N].T + bias_row


def gcn_norm_dense(edge_index, edge_weight, num_nodes):
    """Dense D^{-1/2}(A+I)D^{-1/2} with A_norm[target, source] (plain-JAX glue)."""
    # TODO(synk): for very large graphs build A_norm sparsely (segment ops / SpMM
    # diffusion) instead of this dense scatter-add; the sparse path has no clean
    # dense-Pallas form.
    row, col = edge_index[0], edge_index[1]   # source, target
    if edge_weight is None:
        edge_weight = jnp.ones((row.shape[0],), dtype=jnp.float32)
    loop = jnp.arange(num_nodes, dtype=edge_index.dtype)
    row = jnp.concatenate([row, loop])
    col = jnp.concatenate([col, loop])
    w = jnp.concatenate([edge_weight, jnp.ones((num_nodes,), dtype=jnp.float32)])
    deg = jnp.zeros((num_nodes,), dtype=jnp.float32).at[col].add(w)
    dinv = jnp.where(deg > 0, 1.0 / jnp.sqrt(deg), 0.0)
    wn = dinv[row] * w * dinv[col]
    a = jnp.zeros((num_nodes, num_nodes), dtype=jnp.float32).at[col, row].add(wn)
    return a


def dgc_reference(x, a_norm, weight, bias, *, K: int = 5, t: float = 5.27):
    delta = t / K
    for _ in range(K):
        x = (1.0 - delta) * x + delta * (a_norm @ x)
    return x @ weight + bias.reshape(1, -1)


if __name__ == "__main__":
    N = 512          # num nodes
    F_IN = 16        # in_channels
    F_OUT = 8        # out_channels
    K = 5
    T_TIME = 5.27

    key = jax.random.PRNGKey(0)
    k_x, k_w, k_b = jax.random.split(key, 3)

    # node features
    x = jax.random.normal(k_x, (N, F_IN), dtype=jnp.float32)

    # deterministic small graph: bidirectional ring + bidirectional skip-37 chords
    src = jnp.arange(N, dtype=jnp.int32)
    nbr = (src + 1) % N
    chord = (src + 37) % N
    edge_index = jnp.stack(
        [jnp.concatenate([src, nbr, src, chord]),
         jnp.concatenate([nbr, src, chord, src])], axis=0)   # (2, 4N)

    a_norm = gcn_norm_dense(edge_index, None, N)

    # DGConv.lin parameters (glorot weight, small bias), deterministic in-script.
    limit = jnp.sqrt(6.0 / (F_IN + F_OUT))
    weight = jax.random.uniform(
        k_w, (F_IN, F_OUT), minval=-limit, maxval=limit, dtype=jnp.float32)
    bias = 0.1 * jax.random.normal(k_b, (F_OUT,), dtype=jnp.float32)

    ref = dgc_reference(x, a_norm, weight, bias, K=K, t=T_TIME)

    # Path 1 (default): VMEM-resident M^T, grid=(K,), M^T DMA'd exactly once.
    out_res = jax.block_until_ready(
        dgc_forward(x, a_norm, weight, bias, K=K, t=T_TIME))
    assert out_res.shape == (N, F_OUT)
    assert jnp.allclose(out_res, ref, atol=1e-4, rtol=1e-4), \
        float(jnp.max(jnp.abs(out_res - ref)))

    # Path 2: streamed/tiled fallback (forced small tile to exercise the 3-D grid).
    out_tiled = jax.block_until_ready(
        dgc_forward(x, a_norm, weight, bias, K=K, t=T_TIME,
                    force_tiled=True, node_tile=128))
    assert out_tiled.shape == (N, F_OUT)
    assert jnp.allclose(out_tiled, ref, atol=1e-4, rtol=1e-4), \
        float(jnp.max(jnp.abs(out_tiled - ref)))

    print("KERNEL_OK")
</pallas_src>

<mosaic_0001>
module attributes {stable_mosaic.version = 11 : i64} {
  func.func @_dgc_resident_kernel(%arg0: i32, %arg1: memref<8x512xf32, #tpu.memory_space<vmem>>, %arg2: memref<512x512xf32, #tpu.memory_space<vmem>>, %arg3: memref<8x512xf32, #tpu.memory_space<vmem>>, %arg4: memref<2x8x512xf32, #tpu.memory_space<vmem>>) attributes {dimension_semantics = [#tpu.dimension_semantics<arbitrary>], iteration_bounds = array<i64: 5>, scalar_prefetch = 0 : i64, scratch_operands = 1 : i64, tpu.core_type = #tpu.core_type<tc>, window_params = [{pipeline_mode = #tpu.pipeline_mode<synchronous>, transform_indices = @transform_0, window_bounds = array<i64: 8, 512>}, {pipeline_mode = #tpu.pipeline_mode<synchronous>, transform_indices = @transform_1, window_bounds = array<i64: 512, 512>}, {pipeline_mode = #tpu.pipeline_mode<synchronous>, transform_indices = @transform_2, window_bounds = array<i64: 8, 512>}]} {
    %c2_i32 = arith.constant 2 : i32
    %c0_i32 = arith.constant 0 : i32
    %0 = arith.cmpi eq, %c2_i32, %c0_i32 : i32
    %c1_i32 = arith.constant 1 : i32
    %1 = arith.select %0, %c1_i32, %c2_i32 : i32
    %2 = arith.remsi %arg0, %1 : i32
    %c0_i32_0 = arith.constant 0 : i32
    %3 = arith.cmpi ne, %2, %c0_i32_0 : i32
    %c0_i32_1 = arith.constant 0 : i32
    %4 = arith.cmpi slt, %2, %c0_i32_1 : i32
    %c0_i32_2 = arith.constant 0 : i32
    %5 = arith.cmpi slt, %1, %c0_i32_2 : i32
    %6 = arith.xori %4, %5 : i1
    %7 = arith.andi %6, %3 : i1
    %8 = arith.addi %2, %1 : i32
    %9 = arith.select %7, %8, %2 : i32
    %c1_i32_3 = arith.constant 1 : i32
    %10 = arith.subi %c1_i32_3, %9 : i32
    %c0_i32_4 = arith.constant 0 : i32
    %11 = arith.cmpi eq, %arg0, %c0_i32_4 : i32
    %12 = arith.extui %11 : i1 to i32
    %c0_i32_5 = arith.constant 0 : i32
    %13 = arith.cmpi ne, %12, %c0_i32_5 : i32
    scf.if %13 {
      %c0_12 = arith.constant 0 : index
      %c0_13 = arith.constant 0 : index
      %26 = vector.load %arg1[%c0_12, %c0_13] : memref<8x512xf32, #tpu.memory_space<vmem>>, vector<8x512xf32>
      %c0_14 = arith.constant 0 : index
      %c0_15 = arith.constant 0 : index
      %c0_16 = arith.constant 0 : index
      %27 = vector.load %arg4[%c0_14, %c0_15, %c0_16] : memref<2x8x512xf32, #tpu.memory_space<vmem>>, vector<1x8x512xf32>
      %28 = vector.shape_cast %27 : vector<1x8x512xf32> to vector<8x512xf32>
      %29 = vector.shape_cast %26 : vector<8x512xf32> to vector<1x8x512xf32>
      tpu.vector_store %arg4[%c0_14, %c0_15, %c0_16], %29 {strides = array<i32>} : memref<2x8x512xf32, #tpu.memory_space<vmem>>, vector<1x8x512xf32>,
    } else {
    }
    %14 = arith.index_cast %9 : i32 to index
    %c0 = arith.constant 0 : index
    %c0_6 = arith.constant 0 : index
    %15 = vector.load %arg4[%14, %c0, %c0_6] : memref<2x8x512xf32, #tpu.memory_space<vmem>>, vector<1x8x512xf32>
    %16 = vector.shape_cast %15 : vector<1x8x512xf32> to vector<8x512xf32>
    %c0_7 = arith.constant 0 : index
    %c0_8 = arith.constant 0 : index
    %17 = vector.load %arg2[%c0_7, %c0_8] : memref<512x512xf32, #tpu.memory_space<vmem>>, vector<512x512xf32>
    %cst = arith.constant dense<0.000000e+00> : vector<8x512xf32>
    %18 = tpu.matmul %16, %17, %cst {dimension_numbers = #tpu.dot_dimension_numbers<[1], [0], [0], [1], [0, 0, 1, 1], [], []>} : vector<8x512xf32>, vector<512x512xf32>, vector<8x512xf32> -> vector<8x512xf32>
    %19 = arith.index_cast %10 : i32 to index
    %c0_9 = arith.constant 0 : index
    %c0_10 = arith.constant 0 : index
    %20 = vector.load %arg4[%19, %c0_9, %c0_10] : memref<2x8x512xf32, #tpu.memory_space<vmem>>, vector<1x8x512xf32>
    %21 = vector.shape_cast %20 : vector<1x8x512xf32> to vector<8x512xf32>
    %22 = vector.shape_cast %18 : vector<8x512xf32> to vector<1x8x512xf32>
    tpu.vector_store %arg4[%19, %c0_9, %c0_10], %22 {strides = array<i32>} : memref<2x8x512xf32, #tpu.memory_space<vmem>>, vector<1x8x512xf32>,
    %c4_i32 = arith.constant 4 : i32
    %23 = arith.cmpi eq, %arg0, %c4_i32 : i32
    %24 = arith.extui %23 : i1 to i32
    %c0_i32_11 = arith.constant 0 : i32
    %25 = arith.cmpi ne, %24, %c0_i32_11 : i32
    scf.if %25 {
      %26 = arith.index_cast %10 : i32 to index
      %c0_12 = arith.constant 0 : index
      %c0_13 = arith.constant 0 : index
      %27 = vector.load %arg4[%26, %c0_12, %c0_13] : memref<2x8x512xf32, #tpu.memory_space<vmem>>, vector<1x8x512xf32>
      %28 = vector.shape_cast %27 : vector<1x8x512xf32> to vector<8x512xf32>
      %c0_14 = arith.constant 0 : index
      %c0_15 = arith.constant 0 : index
      %29 = vector.load %arg3[%c0_14, %c0_15] : memref<8x512xf32, #tpu.memory_space<vmem>>, vector<8x512xf32>
      tpu.vector_store %arg3[%c0_14, %c0_15], %28 {strides = array<i32>} : memref<8x512xf32, #tpu.memory_space<vmem>>, vector<8x512xf32>,
    } else {
    }
    return
  }
  func.func @transform_0(%arg0: i32) -> (i32, i32) {
    %c0_i32 = arith.constant 0 : i32
    %c0_i32_0 = arith.constant 0 : i32
    %c0_i32_1 = arith.constant 0 : i32
    return %c0_i32, %c0_i32_0 : i32, i32
  }
  func.func @transform_1(%arg0: i32) -> (i32, i32) {
    %c0_i32 = arith.constant 0 : i32
    %c0_i32_0 = arith.constant 0 : i32
    %c0_i32_1 = arith.constant 0 : i32
    return %c0_i32, %c0_i32_0 : i32, i32
  }
  func.func @transform_2(%arg0: i32) -> (i32, i32) {
    %c0_i32 = arith.constant 0 : i32
    %c0_i32_0 = arith.constant 0 : i32
    %c0_i32_1 = arith.constant 0 : i32
    return %c0_i32, %c0_i32_0 : i32, i32
  }
}

</mosaic_0001>

<llo_original>
// kernel: tpu_custom_call.1
$region0: #{tpu_custom_call.1}
  #allocation0 [shape = 'u32[]', space=smem, size = 0x4, offset = 0x4, fixed_abs, tag = 'smem constant byte address 0x4 - core index']
  #allocation1 [shape = 'u32[72,128]{1,0:T(1,128)}', space=vmem, size = 0x9000, scoped, tag = 'internal scratch']
  #allocation2 [shape = 'f32[2,8,512]{2,1,0:T(8,128)}', space=vmem, size = 0x8000, scoped, tag = 'scratch operand']
  %s0 = inlined_call_operand.hbm [shape: f32[8,512], index: 0, kind: input, shape index: {}]
  %s1 = inlined_call_operand.hbm [shape: f32[512,512], index: 1, kind: input, shape index: {}]
  %s2 = inlined_call_operand.hbm [shape: f32[8,512], index: 2, kind: output, shape index: {}]
  %s3 = sld [smem:[#allocation0]]
  $region57: #{tpu_custom_call.1} parent=0
    _
  %s5 = ssub.s32 1, %s3
  %s6 = scalar_select 0, %s5, %s3
  $region1: #{tpu_custom_call.1} parent=0
    #allocation3 [shape = 'u8[16384]{0}', space=vmem, size = 0x4000, scoped, tag = 'input window, operand 0, single buffered']
    #allocation4 [shape = 's32[2]{0}', space=sflag, size = 0x8, scoped, tag = 'scoped memory for tpu_custom_call.1']
    #allocation5 [shape = 's32[2]{0}', space=sflag, size = 0x8, scoped, tag = 'scoped memory for tpu_custom_call.1']
    #allocation6 [shape = 'u8[1048576]{0}', space=vmem, size = 0x100000, scoped, tag = 'input window, operand 1, single buffered']
    #allocation7 [shape = 's32[1]{0}', space=sflag, size = 0x4, scoped, tag = 'scoped memory for tpu_custom_call.1']
    #allocation8 [shape = 'u8[16384]{0}', space=vmem, size = 0x4000, scoped, tag = 'output window, operand 0, single buffered']
    %7 = vsyncpa [#allocation4], 0
    %8 = vsyncpa [#allocation7], 0
    %9 = vsyncpa [#allocation5], 0
    loop: start=0, step=1, limit=7
    $region2: #{tpu_custom_call.1} parent=1 // loop_pre_header
      _
    $region3: #{tpu_custom_call.1} parent=1 // loop_header
      %s11 = sphi 0, %s15
      %p12 = scmp.ge.s32.totalorder %s11, 7
      %s19 = sphi 0, %s19
      %s21 = sphi 0, %s19
      %s22 = sphi 0, %s21
      %s36 = sphi 0, %s22
      %s40 = sphi 0, %s40
      %s42 = sphi 0, %s40
      %s43 = sphi 0, %s42
      %s57 = sphi 0, %s43
      %s61 = sphi 0, %s61
      %s63 = sphi 0, %s61
      %s64 = sphi 0, %s63
      %s78 = sphi 0, %s64
    $region4: #{tpu_custom_call.1} parent=1 // loop_header_branch
      %14 = sbr.rel (%p12) target = $region8
    $region5: #{tpu_custom_call.1} parent=1 // loop_body
      %s16 = ssub.s32 %s11, 1
      %s17 = ssub.s32 %s11, 2
      %s18 = sadd.s32 %s11, 1
      %s20 = sadd.s32 %s19, 1
      %p23 = scmp.eq.s32.totalorder %s11, 4
      %p24 = scmp.ne.s32.totalorder %s19, %s21
      %p25 = scmp.eq.s32.totalorder %s11, 0
      %p26 = por %p24, %p25
      %p27 = scmp.ne.s32.totalorder %s19, %s21
      %p28 = scmp.eq.s32.totalorder %s16, 4
      %p29 = por %p27, %p28
      %p30 = scmp.ne.s32.totalorder %s21, %s22
      %p31 = scmp.eq.s32.totalorder %s16, 0
      %p32 = por %p30, %p31
      %p33 = scmp.ne.s32.totalorder %s21, %s22
      %p34 = scmp.eq.s32.totalorder %s17, 4
      %p35 = por %p33, %p34
      %p37 = scmp.ne.s32.totalorder %s22, %s36
      %p38 = scmp.eq.s32.totalorder %s17, 0
      %p39 = por %p37, %p38
      %s41 = sadd.s32 %s40, 1
      %p44 = scmp.eq.s32.totalorder %s11, 4
      %p45 = scmp.ne.s32.totalorder %s40, %s42
      %p46 = scmp.eq.s32.totalorder %s11, 0
      %p47 = por %p45, %p46
      %p48 = scmp.ne.s32.totalorder %s40, %s42
      %p49 = scmp.eq.s32.totalorder %s16, 4
      %p50 = por %p48, %p49
      %p51 = scmp.ne.s32.totalorder %s42, %s43
      %p52 = scmp.eq.s32.totalorder %s16, 0
      %p53 = por %p51, %p52
      %p54 = scmp.ne.s32.totalorder %s42, %s43
      %p55 = scmp.eq.s32.totalorder %s17, 4
      %p56 = por %p54, %p55
      %p58 = scmp.ne.s32.totalorder %s43, %s57
      %p59 = scmp.eq.s32.totalorder %s17, 0
      %p60 = por %p58, %p59
      %s62 = sadd.s32 %s61, 1
      %p65 = scmp.eq.s32.totalorder %s11, 4
      %p66 = scmp.ne.s32.totalorder %s61, %s63
      %p67 = scmp.eq.s32.totalorder %s11, 0
      %p68 = por %p66, %p67
      %p69 = scmp.ne.s32.totalorder %s61, %s63
      %p70 = scmp.eq.s32.totalorder %s16, 4
      %p71 = por %p69, %p70
      %p72 = scmp.ne.s32.totalorder %s63, %s64
      %p73 = scmp.eq.s32.totalorder %s16, 0
      %p74 = por %p72, %p73
      %p75 = scmp.ne.s32.totalorder %s63, %s64
      %p76 = scmp.eq.s32.totalorder %s17, 4
      %p77 = por %p75, %p76
      %p79 = scmp.ne.s32.totalorder %s64, %s78
      %p80 = scmp.eq.s32.totalorder %s17, 0
      %p81 = por %p79, %p80
      %p82 = scmp.le.s32.totalorder 1, %s11
      %p83 = scmp.lt.s32.totalorder %s11, 6
      %p84 = pnand %p82, %p83
      %p85 = pneg %p84
      // Predicated region
      $region9: #{tpu_custom_call.1} parent=5 // pred_check
        _
      $region10: #{tpu_custom_call.1} parent=5 // pred_check_branch
        %87 = sbr.rel (%p84) target = $region12
      $region11: #{tpu_custom_call.1} parent=5 // pred_region
        %s88 = ssub.s32 %s11, 1
        // Predicated region
        $region13: #{tpu_custom_call.1} parent=11 // pred_check
          %p89 = pneg %p32
        $region14: #{tpu_custom_call.1} parent=11 // pred_check_branch
          %91 = sbr.rel (%p89) target = $region16
        $region15: #{tpu_custom_call.1} parent=11 // pred_region
          %93 = vsyncadd [#allocation4], 0
          %s95 = sshll.u32 %s0, 4
          %s96 = int_to_ptr.hbm [resolvable:$true] %s95
          %s97 = sshll.u32 [#allocation3], 4
          %s98 = int_to_ptr.vmem [resolvable:$true] %s97
          %100 = dma.hbm_to_vmem [thread:$0]  %s96, 512, %s98, [#allocation4]
        $region16: #{tpu_custom_call.1} parent=11 // pred_fallthru
          _
        // Predicated region
        $region17: #{tpu_custom_call.1} parent=11 // pred_check
          %p101 = pneg %p53
        $region18: #{tpu_custom_call.1} parent=11 // pred_check_branch
          %103 = sbr.rel (%p101) target = $region20
        $region19: #{tpu_custom_call.1} parent=11 // pred_region
          %105 = vsyncadd [#allocation7], 0
          %s106 = sshll.u32 %s1, 4
          %s107 = int_to_ptr.hbm [resolvable:$true] %s106
          %s108 = sshll.u32 [#allocation6], 4
          %s109 = int_to_ptr.vmem [resolvable:$true] %s108
          %114 = dma.hbm_to_vmem [thread:$0]  %s107, 32768, %s109, [#allocation7], 512, 512, 32
        $region20: #{tpu_custom_call.1} parent=11 // pred_fallthru
          _
      $region12: #{tpu_custom_call.1} parent=5 // pred_fallthru
        _
      %p115 = scmp.lt.s32.totalorder %s11, 5
      // Predicated region
      $region21: #{tpu_custom_call.1} parent=5 // pred_check
        %p116 = pneg %p115
      $region22: #{tpu_custom_call.1} parent=5 // pred_check_branch
        %118 = sbr.rel (%p116) target = $region24
      $region23: #{tpu_custom_call.1} parent=5 // pred_region
        _
      $region24: #{tpu_custom_call.1} parent=5 // pred_fallthru
        _
      %p119 = scmp.le.s32.totalorder 1, %s11
      %p120 = scmp.lt.s32.totalorder %s11, 6
      %p121 = pnand %p119, %p120
      %p122 = pneg %p121
      // Predicated region
      $region25: #{tpu_custom_call.1} parent=5 // pred_check
        _
      $region26: #{tpu_custom_call.1} parent=5 // pred_check_branch
        %124 = sbr.rel (%p121) target = $region28
      $region27: #{tpu_custom_call.1} parent=5 // pred_region
        %s125 = ssub.s32 %s11, 1
        // Predicated region
        $region29: #{tpu_custom_call.1} parent=27 // pred_check
          %p126 = pneg %p32
        $region30: #{tpu_custom_call.1} parent=27 // pred_check_branch
          %128 = sbr.rel (%p126) target = $region32
        $region31: #{tpu_custom_call.1} parent=27 // pred_region
          %130 = dma.done [#allocation4], 512
        $region32: #{tpu_custom_call.1} parent=27 // pred_fallthru
          _
        // Predicated region
        $region33: #{tpu_custom_call.1} parent=27 // pred_check
          %p131 = pneg %p53
        $region34: #{tpu_custom_call.1} parent=27 // pred_check_branch
          %133 = sbr.rel (%p131) target = $region36
        $region35: #{tpu_custom_call.1} parent=27 // pred_region
          %135 = dma.done [#allocation7], 32768
        $region36: #{tpu_custom_call.1} parent=27 // pred_fallthru
          _
        %p136 = pneg %p32
        %p137 = pneg %p29
        %p138 = pneg %p53
        %p139 = pneg %p50
        %p140 = pneg %p74
        %p141 = pneg %p71
        %p142 = scmp.lt.s32.totalorder %s16, 0
        %s143 = ssub.s32 0, %s16
        %s144 = scalar_select %p142, %s143, %s16
        %s145 = sand.u32 %s144, 1
        %s146 = ssub.s32 0, %s145
        %s147 = scalar_select %p142, %s146, %s145
        %p148 = scmp.ne.s32.totalorder %s147, 0
        %p149 = scmp.lt.s32.totalorder %s147, 0
        %p150 = pnand %p149, %p148
        %p151 = pneg %p150
        %s152 = sadd.s32 %s147, 2
        %s153 = scalar_select %p151, %s152, %s147
        %s154 = ssub.s32 1, %s153
        %p155 = scmp.eq.s32.totalorder %s16, 0
        // Predicated region
        $region37: #{tpu_custom_call.1} parent=27 // pred_check
          %p156 = pneg %p155
        $region38: #{tpu_custom_call.1} parent=27 // pred_check_branch
          %158 = sbr.rel (%p156) target = $region40
        $region39: #{tpu_custom_call.1} parent=27 // pred_region
          %v159 = vld [vmem:[#allocation3] sm:$0xff]
          %v160 = vld [vmem:[#allocation3 + $0x8] sm:$0xff]
          %v161 = vld [vmem:[#allocation3 + $0x10] sm:$0xff]
          %v162 = vld [vmem:[#allocation3 + $0x18] sm:$0xff]
          %163 = vst [vmem:[#allocation2] sm:$0xff] %v159
          %164 = vst [vmem:[#allocation2 + $0x8] sm:$0xff] %v160
          %165 = vst [vmem:[#allocation2 + $0x10] sm:$0xff] %v161
          %166 = vst [vmem:[#allocation2 + $0x18] sm:$0xff] %v162
        $region40: #{tpu_custom_call.1} parent=27 // pred_fallthru
          _
        %s167 = smul.u32 %s153, 4
        %s168 = smul.addr %s167, 8
        %s169 = scalar_lea.vmem [#allocation2], %s168
        %v170 = vld [vmem:[%s169] sm:$0xff]
        %v171 = vld [vmem:[%s169 + $0x8] sm:$0xff]
        %v172 = vld [vmem:[%s169 + $0x10] sm:$0xff]
        %v173 = vld [vmem:[%s169 + $0x18] sm:$0xff]
        %v174 = vld [vmem:[#allocation6] sm:$0xff]
        %v175 = vld [vmem:[#allocation6 + $0x8] sm:$0xff]
        %v176 = vld [vmem:[#allocation6 + $0x10] sm:$0xff]
        %v177 = vld [vmem:[#allocation6 + $0x18] sm:$0xff]
        %v178 = vld [vmem:[#allocation6 + $0x20] sm:$0xff]
        %v179 = vld [vmem:[#allocation6 + $0x28] sm:$0xff]
        %v180 = vld [vmem:[#allocation6 + $0x30] sm:$0xff]
        %v181 = vld [vmem:[#allocation6 + $0x38] sm:$0xff]
        %v182 = vld [vmem:[#allocation6 + $0x40] sm:$0xff]
        %v183 = vld [vmem:[#allocation6 + $0x48] sm:$0xff]
        %v184 = vld [vmem:[#allocation6 + $0x50] sm:$0xff]
        %v185 = vld [vmem:[#allocation6 + $0x58] sm:$0xff]
        %v186 = vld [vmem:[#allocation6 + $0x60] sm:$0xff]
        %v187 = vld [vmem:[#allocation6 + $0x68] sm:$0xff]
        %v188 = vld [vmem:[#allocation6 + $0x70] sm:$0xff]
        %v189 = vld [vmem:[#allocation6 + $0x78] sm:$0xff]
        %v190 = vld [vmem:[#allocation6 + $0x80] sm:$0xff]
        %v191 = vld [vmem:[#allocation6 + $0x88] sm:$0xff]
        %v192 = vld [vmem:[#allocation6 + $0x90] sm:$0xff]
        %v193 = vld [vmem:[#allocation6 + $0x98] sm:$0xff]
        %v194 = vld [vmem:[#allocation6 + $0xa0] sm:$0xff]
        %v195 = vld [vmem:[#allocation6 + $0xa8] sm:$0xff]
        %v196 = vld [vmem:[#allocation6 + $0xb0] sm:$0xff]
        %v197 = vld [vmem:[#allocation6 + $0xb8] sm:$0xff]
        %v198 = vld [vmem:[#allocation6 + $0xc0] sm:$0xff]
        %v199 = vld [vmem:[#allocation6 + $0xc8] sm:$0xff]
        %v200 = vld [vmem:[#allocation6 + $0xd0] sm:$0xff]
        %v201 = vld [vmem:[#allocation6 + $0xd8] sm:$0xff]
        %v202 = vld [vmem:[#allocation6 + $0xe0] sm:$0xff]
        %v203 = vld [vmem:[#allocation6 + $0xe8] sm:$0xff]
        %v204 = vld [vmem:[#allocation6 + $0xf0] sm:$0xff]
        %v205 = vld [vmem:[#allocation6 + $0xf8] sm:$0xff]
        %v206 = vld [vmem:[#allocation6 + $0x100] sm:$0xff]
        %v207 = vld [vmem:[#allocation6 + $0x108] sm:$0xff]
        %v208 = vld [vmem:[#allocation6 + $0x110] sm:$0xff]
        %v209 = vld [vmem:[#allocation6 + $0x118] sm:$0xff]
        %v210 = vld [vmem:[#allocation6 + $0x120] sm:$0xff]
        %v211 = vld [vmem:[#allocation6 + $0x128] sm:$0xff]
        %v212 = vld [vmem:[#allocation6 + $0x130] sm:$0xff]
        %v213 = vld [vmem:[#allocation6 + $0x138] sm:$0xff]
        %v214 = vld [vmem:[#allocation6 + $0x140] sm:$0xff]
        %v215 = vld [vmem:[#allocation6 + $0x148] sm:$0xff]
        %v216 = vld [vmem:[#allocation6 + $0x150] sm:$0xff]
        %v217 = vld [vmem:[#allocation6 + $0x158] sm:$0xff]
        %v218 = vld [vmem:[#allocation6 + $0x160] sm:$0xff]
        %v219 = vld [vmem:[#allocation6 + $0x168] sm:$0xff]
        %v220 = vld [vmem:[#allocation6 + $0x170] sm:$0xff]
        %v221 = vld [vmem:[#allocation6 + $0x178] sm:$0xff]
        %v222 = vld [vmem:[#allocation6 + $0x180] sm:$0xff]
        %v223 = vld [vmem:[#allocation6 + $0x188] sm:$0xff]
        %v224 = vld [vmem:[#allocation6 + $0x190] sm:$0xff]
        %v225 = vld [vmem:[#allocation6 + $0x198] sm:$0xff]
        %v226 = vld [vmem:[#allocation6 + $0x1a0] sm:$0xff]
        %v227 = vld [vmem:[#allocation6 + $0x1a8] sm:$0xff]
        %v228 = vld [vmem:[#allocation6 + $0x1b0] sm:$0xff]
        %v229 = vld [vmem:[#allocation6 + $0x1b8] sm:$0xff]
        %v230 = vld [vmem:[#allocation6 + $0x1c0] sm:$0xff]
        %v231 = vld [vmem:[#allocation6 + $0x1c8] sm:$0xff]
        %v232 = vld [vmem:[#allocation6 + $0x1d0] sm:$0xff]
        %v233 = vld [vmem:[#allocation6 + $0x1d8] sm:$0xff]
        %v234 = vld [vmem:[#allocation6 + $0x1e0] sm:$0xff]
        %v235 = vld [vmem:[#allocation6 + $0x1e8] sm:$0xff]
        %v236 = vld [vmem:[#allocation6 + $0x1f0] sm:$0xff]
        %v237 = vld [vmem:[#allocation6 + $0x1f8] sm:$0xff]
        %v238 = vld [vmem:[#allocation6 + $0x200] sm:$0xff]
        %v239 = vld [vmem:[#allocation6 + $0x208] sm:$0xff]
        %v240 = vld [vmem:[#allocation6 + $0x210] sm:$0xff]
        %v241 = vld [vmem:[#allocation6 + $0x218] sm:$0xff]
        %v242 = vld [vmem:[#allocation6 + $0x220] sm:$0xff]
        %v243 = vld [vmem:[#allocation6 + $0x228] sm:$0xff]
        %v244 = vld [vmem:[#allocation6 + $0x230] sm:$0xff]
        %v245 = vld [vmem:[#allocation6 + $0x238] sm:$0xff]
        %v246 = vld [vmem:[#allocation6 + $0x240] sm:$0xff]
        %v247 = vld [vmem:[#allocation6 + $0x248] sm:$0xff]
        %v248 = vld [vmem:[#allocation6 + $0x250] sm:$0xff]
        %v249 = vld [vmem:[#allocation6 + $0x258] sm:$0xff]
        %v250 = vld [vmem:[#allocation6 + $0x260] sm:$0xff]
        %v251 = vld [vmem:[#allocation6 + $0x268] sm:$0xff]
        %v252 = vld [vmem:[#allocation6 + $0x270] sm:$0xff]
        %v253 = vld [vmem:[#allocation6 + $0x278] sm:$0xff]
        %v254 = vld [vmem:[#allocation6 + $0x280] sm:$0xff]
        %v255 = vld [vmem:[#allocation6 + $0x288] sm:$0xff]
        %v256 = vld [vmem:[#allocation6 + $0x290] sm:$0xff]
        %v257 = vld [vmem:[#allocation6 + $0x298] sm:$0xff]
        %v258 = vld [vmem:[#allocation6 + $0x2a0] sm:$0xff]
        %v259 = vld [vmem:[#allocation6 + $0x2a8] sm:$0xff]
        %v260 = vld [vmem:[#allocation6 + $0x2b0] sm:$0xff]
        %v261 = vld [vmem:[#allocation6 + $0x2b8] sm:$0xff]
        %v262 = vld [vmem:[#allocation6 + $0x2c0] sm:$0xff]
        %v263 = vld [vmem:[#allocation6 + $0x2c8] sm:$0xff]
        %v264 = vld [vmem:[#allocation6 + $0x2d0] sm:$0xff]
        %v265 = vld [vmem:[#allocation6 + $0x2d8] sm:$0xff]
        %v266 = vld [vmem:[#allocation6 + $0x2e0] sm:$0xff]
        %v267 = vld [vmem:[#allocation6 + $0x2e8] sm:$0xff]
        %v268 = vld [vmem:[#allocation6 + $0x2f0] sm:$0xff]
        %v269 = vld [vmem:[#allocation6 + $0x2f8] sm:$0xff]
        %v270 = vld [vmem:[#allocation6 + $0x300] sm:$0xff]
        %v271 = vld [vmem:[#allocation6 + $0x308] sm:$0xff]
        %v272 = vld [vmem:[#allocation6 + $0x310] sm:$0xff]
        %v273 = vld [vmem:[#allocation6 + $0x318] sm:$0xff]
        %v274 = vld [vmem:[#allocation6 + $0x320] sm:$0xff]
        %v275 = vld [vmem:[#allocation6 + $0x328] sm:$0xff]
        %v276 = vld [vmem:[#allocation6 + $0x330] sm:$0xff]
        %v277 = vld [vmem:[#allocation6 + $0x338] sm:$0xff]
        %v278 = vld [vmem:[#allocation6 + $0x340] sm:$0xff]
        %v279 = vld [vmem:[#allocation6 + $0x348] sm:$0xff]
        %v280 = vld [vmem:[#allocation6 + $0x350] sm:$0xff]
        %v281 = vld [vmem:[#allocation6 + $0x358] sm:$0xff]
        %v282 = vld [vmem:[#allocation6 + $0x360] sm:$0xff]
        %v283 = vld [vmem:[#allocation6 + $0x368] sm:$0xff]
        %v284 = vld [vmem:[#allocation6 + $0x370] sm:$0xff]
        %v285 = vld [vmem:[#allocation6 + $0x378] sm:$0xff]
        %v286 = vld [vmem:[#allocation6 + $0x380] sm:$0xff]
        %v287 = vld [vmem:[#allocation6 + $0x388] sm:$0xff]
        %v288 = vld [vmem:[#allocation6 + $0x390] sm:$0xff]
        %v289 = vld [vmem:[#allocation6 + $0x398] sm:$0xff]
        %v290 = vld [vmem:[#allocation6 + $0x3a0] sm:$0xff]
        %v291 = vld [vmem:[#allocation6 + $0x3a8] sm:$0xff]
        %v292 = vld [vmem:[#allocation6 + $0x3b0] sm:$0xff]
        %v293 = vld [vmem:[#allocation6 + $0x3b8] sm:$0xff]
        %v294 = vld [vmem:[#allocation6 + $0x3c0] sm:$0xff]
        %v295 = vld [vmem:[#allocation6 + $0x3c8] sm:$0xff]
        %v296 = vld [vmem:[#allocation6 + $0x3d0] sm:$0xff]
        %v297 = vld [vmem:[#allocation6 + $0x3d8] sm:$0xff]
        %v298 = vld [vmem:[#allocation6 + $0x3e0] sm:$0xff]
        %v299 = vld [vmem:[#allocation6 + $0x3e8] sm:$0xff]
        %v300 = vld [vmem:[#allocation6 + $0x3f0] sm:$0xff]
        %v301 = vld [vmem:[#allocation6 + $0x3f8] sm:$0xff]
        %v302 = vld [vmem:[#allocation6 + $0x400] sm:$0xff]
        %v303 = vld [vmem:[#allocation6 + $0x408] sm:$0xff]
        %v304 = vld [vmem:[#allocation6 + $0x410] sm:$0xff]
        %v305 = vld [vmem:[#allocation6 + $0x418] sm:$0xff]
        %v306 = vld [vmem:[#allocation6 + $0x420] sm:$0xff]
        %v307 = vld [vmem:[#allocation6 + $0x428] sm:$0xff]
        %v308 = vld [vmem:[#allocation6 + $0x430] sm:$0xff]
        %v309 = vld [vmem:[#allocation6 + $0x438] sm:$0xff]
        %v310 = vld [vmem:[#allocation6 + $0x440] sm:$0xff]
        %v311 = vld [vmem:[#allocation6 + $0x448] sm:$0xff]
        %v312 = vld [vmem:[#allocation6 + $0x450] sm:$0xff]
        %v313 = vld [vmem:[#allocation6 + $0x458] sm:$0xff]
        %v314 = vld [vmem:[#allocation6 + $0x460] sm:$0xff]
        %v315 = vld [vmem:[#allocation6 + $0x468] sm:$0xff]
        %v316 = vld [vmem:[#allocation6 + $0x470] sm:$0xff]
        %v317 = vld [vmem:[#allocation6 + $0x478] sm:$0xff]
        %v318 = vld [vmem:[#allocation6 + $0x480] sm:$0xff]
        %v319 = vld [vmem:[#allocation6 + $0x488] sm:$0xff]
        %v320 = vld [vmem:[#allocation6 + $0x490] sm:$0xff]
        %v321 = vld [vmem:[#allocation6 + $0x498] sm:$0xff]
        %v322 = vld [vmem:[#allocation6 + $0x4a0] sm:$0xff]
        %v323 = vld [vmem:[#allocation6 + $0x4a8] sm:$0xff]
        %v324 = vld [vmem:[#allocation6 + $0x4b0] sm:$0xff]
        %v325 = vld [vmem:[#allocation6 + $0x4b8] sm:$0xff]
        %v326 = vld [vmem:[#allocation6 + $0x4c0] sm:$0xff]
        %v327 = vld [vmem:[#allocation6 + $0x4c8] sm:$0xff]
        %v328 = vld [vmem:[#allocation6 + $0x4d0] sm:$0xff]
        %v329 = vld [vmem:[#allocation6 + $0x4d8] sm:$0xff]
        %v330 = vld [vmem:[#allocation6 + $0x4e0] sm:$0xff]
        %v331 = vld [vmem:[#allocation6 + $0x4e8] sm:$0xff]
        %v332 = vld [vmem:[#allocation6 + $0x4f0] sm:$0xff]
        %v333 = vld [vmem:[#allocation6 + $0x4f8] sm:$0xff]
        %v334 = vld [vmem:[#allocation6 + $0x500] sm:$0xff]
        %v335 = vld [vmem:[#allocation6 + $0x508] sm:$0xff]
        %v336 = vld [vmem:[#allocation6 + $0x510] sm:$0xff]
        %v337 = vld [vmem:[#allocation6 + $0x518] sm:$0xff]
        %v338 = vld [vmem:[#allocation6 + $0x520] sm:$0xff]
        %v339 = vld [vmem:[#allocation6 + $0x528] sm:$0xff]
        %v340 = vld [vmem:[#allocation6 + $0x530] sm:$0xff]
        %v341 = vld [vmem:[#allocation6 + $0x538] sm:$0xff]
        %v342 = vld [vmem:[#allocation6 + $0x540] sm:$0xff]
        %v343 = vld [vmem:[#allocation6 + $0x548] sm:$0xff]
        %v344 = vld [vmem:[#allocation6 + $0x550] sm:$0xff]
        %v345 = vld [vmem:[#allocation6 + $0x558] sm:$0xff]
        %v346 = vld [vmem:[#allocation6 + $0x560] sm:$0xff]
        %v347 = vld [vmem:[#allocation6 + $0x568] sm:$0xff]
        %v348 = vld [vmem:[#allocation6 + $0x570] sm:$0xff]
        %v349 = vld [vmem:[#allocation6 + $0x578] sm:$0xff]
        %v350 = vld [vmem:[#allocation6 + $0x580] sm:$0xff]
        %v351 = vld [vmem:[#allocation6 + $0x588] sm:$0xff]
        %v352 = vld [vmem:[#allocation6 + $0x590] sm:$0xff]
        %v353 = vld [vmem:[#allocation6 + $0x598] sm:$0xff]
        %v354 = vld [vmem:[#allocation6 + $0x5a0] sm:$0xff]
        %v355 = vld [vmem:[#allocation6 + $0x5a8] sm:$0xff]
        %v356 = vld [vmem:[#allocation6 + $0x5b0] sm:$0xff]
        %v357 = vld [vmem:[#allocation6 + $0x5b8] sm:$0xff]
        %v358 = vld [vmem:[#allocation6 + $0x5c0] sm:$0xff]
        %v359 = vld [vmem:[#allocation6 + $0x5c8] sm:$0xff]
        %v360 = vld [vmem:[#allocation6 + $0x5d0] sm:$0xff]
        %v361 = vld [vmem:[#allocation6 + $0x5d8] sm:$0xff]
        %v362 = vld [vmem:[#allocation6 + $0x5e0] sm:$0xff]
        %v363 = vld [vmem:[#allocation6 + $0x5e8] sm:$0xff]
        %v364 = vld [vmem:[#allocation6 + $0x5f0] sm:$0xff]
        %v365 = vld [vmem:[#allocation6 + $0x5f8] sm:$0xff]
        %v366 = vld [vmem:[#allocation6 + $0x600] sm:$0xff]
        %v367 = vld [vmem:[#allocation6 + $0x608] sm:$0xff]
        %v368 = vld [vmem:[#allocation6 + $0x610] sm:$0xff]
        %v369 = vld [vmem:[#allocation6 + $0x618] sm:$0xff]
        %v370 = vld [vmem:[#allocation6 + $0x620] sm:$0xff]
        %v371 = vld [vmem:[#allocation6 + $0x628] sm:$0xff]
        %v372 = vld [vmem:[#allocation6 + $0x630] sm:$0xff]
        %v373 = vld [vmem:[#allocation6 + $0x638] sm:$0xff]
        %v374 = vld [vmem:[#allocation6 + $0x640] sm:$0xff]
        %v375 = vld [vmem:[#allocation6 + $0x648] sm:$0xff]
        %v376 = vld [vmem:[#allocation6 + $0x650] sm:$0xff]
        %v377 = vld [vmem:[#allocation6 + $0x658] sm:$0xff]
        %v378 = vld [vmem:[#allocation6 + $0x660] sm:$0xff]
        %v379 = vld [vmem:[#allocation6 + $0x668] sm:$0xff]
        %v380 = vld [vmem:[#allocation6 + $0x670] sm:$0xff]
        %v381 = vld [vmem:[#allocation6 + $0x678] sm:$0xff]
        %v382 = vld [vmem:[#allocation6 + $0x680] sm:$0xff]
        %v383 = vld [vmem:[#allocation6 + $0x688] sm:$0xff]
        %v384 = vld [vmem:[#allocation6 + $0x690] sm:$0xff]
        %v385 = vld [vmem:[#allocation6 + $0x698] sm:$0xff]
        %v386 = vld [vmem:[#allocation6 + $0x6a0] sm:$0xff]
        %v387 = vld [vmem:[#allocation6 + $0x6a8] sm:$0xff]
        %v388 = vld [vmem:[#allocation6 + $0x6b0] sm:$0xff]
        %v389 = vld [vmem:[#allocation6 + $0x6b8] sm:$0xff]
        %v390 = vld [vmem:[#allocation6 + $0x6c0] sm:$0xff]
        %v391 = vld [vmem:[#allocation6 + $0x6c8] sm:$0xff]
        %v392 = vld [vmem:[#allocation6 + $0x6d0] sm:$0xff]
        %v393 = vld [vmem:[#allocation6 + $0x6d8] sm:$0xff]
        %v394 = vld [vmem:[#allocation6 + $0x6e0] sm:$0xff]
        %v395 = vld [vmem:[#allocation6 + $0x6e8] sm:$0xff]
        %v396 = vld [vmem:[#allocation6 + $0x6f0] sm:$0xff]
        %v397 = vld [vmem:[#allocation6 + $0x6f8] sm:$0xff]
        %v398 = vld [vmem:[#allocation6 + $0x700] sm:$0xff]
        %v399 = vld [vmem:[#allocation6 + $0x708] sm:$0xff]
        %v400 = vld [vmem:[#allocation6 + $0x710] sm:$0xff]
        %v401 = vld [vmem:[#allocation6 + $0x718] sm:$0xff]
        %v402 = vld [vmem:[#allocation6 + $0x720] sm:$0xff]
        %v403 = vld [vmem:[#allocation6 + $0x728] sm:$0xff]
        %v404 = vld [vmem:[#allocation6 + $0x730] sm:$0xff]
        %v405 = vld [vmem:[#allocation6 + $0x738] sm:$0xff]
        %v406 = vld [vmem:[#allocation6 + $0x740] sm:$0xff]
        %v407 = vld [vmem:[#allocation6 + $0x748] sm:$0xff]
        %v408 = vld [vmem:[#allocation6 + $0x750] sm:$0xff]
        %v409 = vld [vmem:[#allocation6 + $0x758] sm:$0xff]
        %v410 = vld [vmem:[#allocation6 + $0x760] sm:$0xff]
        %v411 = vld [vmem:[#allocation6 + $0x768] sm:$0xff]
        %v412 = vld [vmem:[#allocation6 + $0x770] sm:$0xff]
        %v413 = vld [vmem:[#allocation6 + $0x778] sm:$0xff]
        %v414 = vld [vmem:[#allocation6 + $0x780] sm:$0xff]
        %v415 = vld [vmem:[#allocation6 + $0x788] sm:$0xff]
        %v416 = vld [vmem:[#allocation6 + $0x790] sm:$0xff]
        %v417 = vld [vmem:[#allocation6 + $0x798] sm:$0xff]
        %v418 = vld [vmem:[#allocation6 + $0x7a0] sm:$0xff]
        %v419 = vld [vmem:[#allocation6 + $0x7a8] sm:$0xff]
        %v420 = vld [vmem:[#allocation6 + $0x7b0] sm:$0xff]
        %v421 = vld [vmem:[#allocation6 + $0x7b8] sm:$0xff]
        %v422 = vld [vmem:[#allocation6 + $0x7c0] sm:$0xff]
        %v423 = vld [vmem:[#allocation6 + $0x7c8] sm:$0xff]
        %v424 = vld [vmem:[#allocation6 + $0x7d0] sm:$0xff]
        %v425 = vld [vmem:[#allocation6 + $0x7d8] sm:$0xff]
        %v426 = vld [vmem:[#allocation6 + $0x7e0] sm:$0xff]
        %v427 = vld [vmem:[#allocation6 + $0x7e8] sm:$0xff]
        %v428 = vld [vmem:[#allocation6 + $0x7f0] sm:$0xff]
        %v429 = vld [vmem:[#allocation6 + $0x7f8] sm:$0xff]
        %430 = vmatpush.msra.mxu0 %v234
        %431 = vmatpush.msra.mxu0 %v230
        %432 = vmatpush.msra.mxu0 %v226
        %433 = vmatpush.msra.mxu0 %v222
        %434 = vmatpush.msra.mxu0 %v218
        %435 = vmatpush.msra.mxu0 %v214
        %436 = vmatpush.msra.mxu0 %v210
        %437 = vmatpush.msra.mxu0 %v206
        %438 = vmatpush.msra.mxu0 %v202
        %439 = vmatpush.msra.mxu0 %v198
        %440 = vmatpush.msra.mxu0 %v194
        %441 = vmatpush.msra.mxu0 %v190
        %442 = vmatpush.msra.mxu0 %v186
        %443 = vmatpush.msra.mxu0 %v182
        %444 = vmatpush.msra.mxu0 %v178
        %445 = vmatpush.msra.mxu0 %v174
        %446 = vmatmul.f32.gmra.mxu0 %v170
        %v447 = vpop.f32.mrf.mxu0
        %v448 = vadd.f32 0.0, %v447
        %449 = vdwg.mxu0
        %450 = vmatpush.msra.mxu0 %v298
        %451 = vmatpush.msra.mxu0 %v294
        %452 = vmatpush.msra.mxu0 %v290
        %453 = vmatpush.msra.mxu0 %v286
        %454 = vmatpush.msra.mxu0 %v282
        %455 = vmatpush.msra.mxu0 %v278
        %456 = vmatpush.msra.mxu0 %v274
        %457 = vmatpush.msra.mxu0 %v270
        %458 = vmatpush.msra.mxu0 %v266
        %459 = vmatpush.msra.mxu0 %v262
        %460 = vmatpush.msra.mxu0 %v258
        %461 = vmatpush.msra.mxu0 %v254
        %462 = vmatpush.msra.mxu0 %v250
        %463 = vmatpush.msra.mxu0 %v246
        %464 = vmatpush.msra.mxu0 %v242
        %465 = vmatpush.msra.mxu0 %v238
        %466 = vmatmul.f32.gmra.mxu0 %v171
        %v467 = vpop.f32.mrf.mxu0
        %v468 = vadd.f32 %v448, %v467
        %469 = vdwg.mxu0
        %470 = vmatpush.msra.mxu0 %v362
        %471 = vmatpush.msra.mxu0 %v358
        %472 = vmatpush.msra.mxu0 %v354
        %473 = vmatpush.msra.mxu0 %v350
        %474 = vmatpush.msra.mxu0 %v346
        %475 = vmatpush.msra.mxu0 %v342
        %476 = vmatpush.msra.mxu0 %v338
        %477 = vmatpush.msra.mxu0 %v334
        %478 = vmatpush.msra.mxu0 %v330
        %479 = vmatpush.msra.mxu0 %v326
        %480 = vmatpush.msra.mxu0 %v322
        %481 = vmatpush.msra.mxu0 %v318
        %482 = vmatpush.msra.mxu0 %v314
        %483 = vmatpush.msra.mxu0 %v310
        %484 = vmatpush.msra.mxu0 %v306
        %485 = vmatpush.msra.mxu0 %v302
        %486 = vmatmul.f32.gmra.mxu0 %v172
        %v487 = vpop.f32.mrf.mxu0
        %v488 = vadd.f32 %v468, %v487
        %489 = vdwg.mxu0
        %490 = vmatpush.msra.mxu0 %v426
        %491 = vmatpush.msra.mxu0 %v422
        %492 = vmatpush.msra.mxu0 %v418
        %493 = vmatpush.msra.mxu0 %v414
        %494 = vmatpush.msra.mxu0 %v410
        %495 = vmatpush.msra.mxu0 %v406
        %496 = vmatpush.msra.mxu0 %v402
        %497 = vmatpush.msra.mxu0 %v398
        %498 = vmatpush.msra.mxu0 %v394
        %499 = vmatpush.msra.mxu0 %v390
        %500 = vmatpush.msra.mxu0 %v386
        %501 = vmatpush.msra.mxu0 %v382
        %502 = vmatpush.msra.mxu0 %v378
        %503 = vmatpush.msra.mxu0 %v374
        %504 = vmatpush.msra.mxu0 %v370
        %505 = vmatpush.msra.mxu0 %v366
        %506 = vmatmul.f32.gmra.mxu0 %v173
        %v507 = vpop.f32.mrf.mxu0
        %v508 = vadd.f32 %v488, %v507
        %509 = vdwg.mxu0
        %510 = vmatpush.msra.mxu0 %v235
        %511 = vmatpush.msra.mxu0 %v231
        %512 = vmatpush.msra.mxu0 %v227
        %513 = vmatpush.msra.mxu0 %v223
        %514 = vmatpush.msra.mxu0 %v219
        %515 = vmatpush.msra.mxu0 %v215
        %516 = vmatpush.msra.mxu0 %v211
        %517 = vmatpush.msra.mxu0 %v207
        %518 = vmatpush.msra.mxu0 %v203
        %519 = vmatpush.msra.mxu0 %v199
        %520 = vmatpush.msra.mxu0 %v195
        %521 = vmatpush.msra.mxu0 %v191
        %522 = vmatpush.msra.mxu0 %v187
        %523 = vmatpush.msra.mxu0 %v183
        %524 = vmatpush.msra.mxu0 %v179
        %525 = vmatpush.msra.mxu0 %v175
        %526 = vmatmul.f32.gmra.mxu0 %v170
        %v527 = vpop.f32.mrf.mxu0
        %v528 = vadd.f32 0.0, %v527
        %529 = vdwg.mxu0
        %530 = vmatpush.msra.mxu0 %v299
        %531 = vmatpush.msra.mxu0 %v295
        %532 = vmatpush.msra.mxu0 %v291
        %533 = vmatpush.msra.mxu0 %v287
        %534 = vmatpush.msra.mxu0 %v283
        %535 = vmatpush.msra.mxu0 %v279
        %536 = vmatpush.msra.mxu0 %v275
        %537 = vmatpush.msra.mxu0 %v271
        %538 = vmatpush.msra.mxu0 %v267
        %539 = vmatpush.msra.mxu0 %v263
        %540 = vmatpush.msra.mxu0 %v259
        %541 = vmatpush.msra.mxu0 %v255
        %542 = vmatpush.msra.mxu0 %v251
        %543 = vmatpush.msra.mxu0 %v247
        %544 = vmatpush.msra.mxu0 %v243
        %545 = vmatpush.msra.mxu0 %v239
        %546 = vmatmul.f32.gmra.mxu0 %v171
        %v547 = vpop.f32.mrf.mxu0
        %v548 = vadd.f32 %v528, %v547
        %549 = vdwg.mxu0
        %550 = vmatpush.msra.mxu0 %v363
        %551 = vmatpush.msra.mxu0 %v359
        %552 = vmatpush.msra.mxu0 %v355
        %553 = vmatpush.msra.mxu0 %v351
        %554 = vmatpush.msra.mxu0 %v347
        %555 = vmatpush.msra.mxu0 %v343
        %556 = vmatpush.msra.mxu0 %v339
        %557 = vmatpush.msra.mxu0 %v335
        %558 = vmatpush.msra.mxu0 %v331
        %559 = vmatpush.msra.mxu0 %v327
        %560 = vmatpush.msra.mxu0 %v323
        %561 = vmatpush.msra.mxu0 %v319
        %562 = vmatpush.msra.mxu0 %v315
        %563 = vmatpush.msra.mxu0 %v311
        %564 = vmatpush.msra.mxu0 %v307
        %565 = vmatpush.msra.mxu0 %v303
        %566 = vmatmul.f32.gmra.mxu0 %v172
        %v567 = vpop.f32.mrf.mxu0
        %v568 = vadd.f32 %v548, %v567
        %569 = vdwg.mxu0
        %570 = vmatpush.msra.mxu0 %v427
        %571 = vmatpush.msra.mxu0 %v423
        %572 = vmatpush.msra.mxu0 %v419
        %573 = vmatpush.msra.mxu0 %v415
        %574 = vmatpush.msra.mxu0 %v411
        %575 = vmatpush.msra.mxu0 %v407
        %576 = vmatpush.msra.mxu0 %v403
        %577 = vmatpush.msra.mxu0 %v399
        %578 = vmatpush.msra.mxu0 %v395
        %579 = vmatpush.msra.mxu0 %v391
        %580 = vmatpush.msra.mxu0 %v387
        %581 = vmatpush.msra.mxu0 %v383
        %582 = vmatpush.msra.mxu0 %v379
        %583 = vmatpush.msra.mxu0 %v375
        %584 = vmatpush.msra.mxu0 %v371
        %585 = vmatpush.msra.mxu0 %v367
        %586 = vmatmul.f32.gmra.mxu0 %v173
        %v587 = vpop.f32.mrf.mxu0
        %v588 = vadd.f32 %v568, %v587
        %589 = vdwg.mxu0
        %590 = vmatpush.msra.mxu0 %v236
        %591 = vmatpush.msra.mxu0 %v232
        %592 = vmatpush.msra.mxu0 %v228
        %593 = vmatpush.msra.mxu0 %v224
        %594 = vmatpush.msra.mxu0 %v220
        %595 = vmatpush.msra.mxu0 %v216
        %596 = vmatpush.msra.mxu0 %v212
        %597 = vmatpush.msra.mxu0 %v208
        %598 = vmatpush.msra.mxu0 %v204
        %599 = vmatpush.msra.mxu0 %v200
        %600 = vmatpush.msra.mxu0 %v196
        %601 = vmatpush.msra.mxu0 %v192
        %602 = vmatpush.msra.mxu0 %v188
        %603 = vmatpush.msra.mxu0 %v184
        %604 = vmatpush.msra.mxu0 %v180
        %605 = vmatpush.msra.mxu0 %v176
        %606 = vmatmul.f32.gmra.mxu0 %v170
        %v607 = vpop.f32.mrf.mxu0
        %v608 = vadd.f32 0.0, %v607
        %609 = vdwg.mxu0
        %610 = vmatpush.msra.mxu0 %v300
        %611 = vmatpush.msra.mxu0 %v296
        %612 = vmatpush.msra.mxu0 %v292
        %613 = vmatpush.msra.mxu0 %v288
        %614 = vmatpush.msra.mxu0 %v284
        %615 = vmatpush.msra.mxu0 %v280
        %616 = vmatpush.msra.mxu0 %v276
        %617 = vmatpush.msra.mxu0 %v272
        %618 = vmatpush.msra.mxu0 %v268
        %619 = vmatpush.msra.mxu0 %v264
        %620 = vmatpush.msra.mxu0 %v260
        %621 = vmatpush.msra.mxu0 %v256
        %622 = vmatpush.msra.mxu0 %v252
        %623 = vmatpush.msra.mxu0 %v248
        %624 = vmatpush.msra.mxu0 %v244
        %625 = vmatpush.msra.mxu0 %v240
        %626 = vmatmul.f32.gmra.mxu0 %v171
        %v627 = vpop.f32.mrf.mxu0
        %v628 = vadd.f32 %v608, %v627
        %629 = vdwg.mxu0
        %630 = vmatpush.msra.mxu0 %v364
        %631 = vmatpush.msra.mxu0 %v360
        %632 = vmatpush.msra.mxu0 %v356
        %633 = vmatpush.msra.mxu0 %v352
        %634 = vmatpush.msra.mxu0 %v348
        %635 = vmatpush.msra.mxu0 %v344
        %636 = vmatpush.msra.mxu0 %v340
        %637 = vmatpush.msra.mxu0 %v336
        %638 = vmatpush.msra.mxu0 %v332
        %639 = vmatpush.msra.mxu0 %v328
        %640 = vmatpush.msra.mxu0 %v324
        %641 = vmatpush.msra.mxu0 %v320
        %642 = vmatpush.msra.mxu0 %v316
        %643 = vmatpush.msra.mxu0 %v312
        %644 = vmatpush.msra.mxu0 %v308
        %645 = vmatpush.msra.mxu0 %v304
        %646 = vmatmul.f32.gmra.mxu0 %v172
        %v647 = vpop.f32.mrf.mxu0
        %v648 = vadd.f32 %v628, %v647
        %649 = vdwg.mxu0
        %650 = vmatpush.msra.mxu0 %v428
        %651 = vmatpush.msra.mxu0 %v424
        %652 = vmatpush.msra.mxu0 %v420
        %653 = vmatpush.msra.mxu0 %v416
        %654 = vmatpush.msra.mxu0 %v412
        %655 = vmatpush.msra.mxu0 %v408
        %656 = vmatpush.msra.mxu0 %v404
        %657 = vmatpush.msra.mxu0 %v400
        %658 = vmatpush.msra.mxu0 %v396
        %659 = vmatpush.msra.mxu0 %v392
        %660 = vmatpush.msra.mxu0 %v388
        %661 = vmatpush.msra.mxu0 %v384
        %662 = vmatpush.msra.mxu0 %v380
        %663 = vmatpush.msra.mxu0 %v376
        %664 = vmatpush.msra.mxu0 %v372
        %665 = vmatpush.msra.mxu0 %v368
        %666 = vmatmul.f32.gmra.mxu0 %v173
        %v667 = vpop.f32.mrf.mxu0
        %v668 = vadd.f32 %v648, %v667
        %669 = vdwg.mxu0
        %670 = vmatpush.msra.mxu0 %v237
        %671 = vmatpush.msra.mxu0 %v233
        %672 = vmatpush.msra.mxu0 %v229
        %673 = vmatpush.msra.mxu0 %v225
        %674 = vmatpush.msra.mxu0 %v221
        %675 = vmatpush.msra.mxu0 %v217
        %676 = vmatpush.msra.mxu0 %v213
        %677 = vmatpush.msra.mxu0 %v209
        %678 = vmatpush.msra.mxu0 %v205
        %679 = vmatpush.msra.mxu0 %v201
        %680 = vmatpush.msra.mxu0 %v197
        %681 = vmatpush.msra.mxu0 %v193
        %682 = vmatpush.msra.mxu0 %v189
        %683 = vmatpush.msra.mxu0 %v185
        %684 = vmatpush.msra.mxu0 %v181
        %685 = vmatpush.msra.mxu0 %v177
        %686 = vmatmul.f32.gmra.mxu0 %v170
        %v687 = vpop.f32.mrf.mxu0
        %v688 = vadd.f32 0.0, %v687
        %689 = vdwg.mxu0
        %690 = vmatpush.msra.mxu0 %v301
        %691 = vmatpush.msra.mxu0 %v297
        %692 = vmatpush.msra.mxu0 %v293
        %693 = vmatpush.msra.mxu0 %v289
        %694 = vmatpush.msra.mxu0 %v285
        %695 = vmatpush.msra.mxu0 %v281
        %696 = vmatpush.msra.mxu0 %v277
        %697 = vmatpush.msra.mxu0 %v273
        %698 = vmatpush.msra.mxu0 %v269
        %699 = vmatpush.msra.mxu0 %v265
        %700 = vmatpush.msra.mxu0 %v261
        %701 = vmatpush.msra.mxu0 %v257
        %702 = vmatpush.msra.mxu0 %v253
        %703 = vmatpush.msra.mxu0 %v249
        %704 = vmatpush.msra.mxu0 %v245
        %705 = vmatpush.msra.mxu0 %v241
        %706 = vmatmul.f32.gmra.mxu0 %v171
        %v707 = vpop.f32.mrf.mxu0
        %v708 = vadd.f32 %v688, %v707
        %709 = vdwg.mxu0
        %710 = vmatpush.msra.mxu0 %v365
        %711 = vmatpush.msra.mxu0 %v361
        %712 = vmatpush.msra.mxu0 %v357
        %713 = vmatpush.msra.mxu0 %v353
        %714 = vmatpush.msra.mxu0 %v349
        %715 = vmatpush.msra.mxu0 %v345
        %716 = vmatpush.msra.mxu0 %v341
        %717 = vmatpush.msra.mxu0 %v337
        %718 = vmatpush.msra.mxu0 %v333
        %719 = vmatpush.msra.mxu0 %v329
        %720 = vmatpush.msra.mxu0 %v325
        %721 = vmatpush.msra.mxu0 %v321
        %722 = vmatpush.msra.mxu0 %v317
        %723 = vmatpush.msra.mxu0 %v313
        %724 = vmatpush.msra.mxu0 %v309
        %725 = vmatpush.msra.mxu0 %v305
        %726 = vmatmul.f32.gmra.mxu0 %v172
        %v727 = vpop.f32.mrf.mxu0
        %v728 = vadd.f32 %v708, %v727
        %729 = vdwg.mxu0
        %730 = vmatpush.msra.mxu0 %v429
        %731 = vmatpush.msra.mxu0 %v425
        %732 = vmatpush.msra.mxu0 %v421
        %733 = vmatpush.msra.mxu0 %v417
        %734 = vmatpush.msra.mxu0 %v413
        %735 = vmatpush.msra.mxu0 %v409
        %736 = vmatpush.msra.mxu0 %v405
        %737 = vmatpush.msra.mxu0 %v401
        %738 = vmatpush.msra.mxu0 %v397
        %739 = vmatpush.msra.mxu0 %v393
        %740 = vmatpush.msra.mxu0 %v389
        %741 = vmatpush.msra.mxu0 %v385
        %742 = vmatpush.msra.mxu0 %v381
        %743 = vmatpush.msra.mxu0 %v377
        %744 = vmatpush.msra.mxu0 %v373
        %745 = vmatpush.msra.mxu0 %v369
        %746 = vmatmul.f32.gmra.mxu0 %v173
        %v747 = vpop.f32.mrf.mxu0
        %v748 = vadd.f32 %v728, %v747
        %749 = vdwg.mxu0
        %s750 = smul.u32 %s154, 4
        %s751 = smul.addr %s750, 8
        %s752 = scalar_lea.vmem [#allocation2], %s751
        %753 = vst [vmem:[%s752] sm:$0xff] %v508
        %754 = vst [vmem:[%s752 + $0x8] sm:$0xff] %v588
        %755 = vst [vmem:[%s752 + $0x10] sm:$0xff] %v668
        %756 = vst [vmem:[%s752 + $0x18] sm:$0xff] %v748
        %p757 = scmp.eq.s32.totalorder %s16, 4
        // Predicated region
        $region41: #{tpu_custom_call.1} parent=27 // pred_check
          %p758 = pneg %p757
        $region42: #{tpu_custom_call.1} parent=27 // pred_check_branch
          %760 = sbr.rel (%p758) target = $region44
        $region43: #{tpu_custom_call.1} parent=27 // pred_region
          %v761 = vld [vmem:[%s752] sm:$0xff]
          %v762 = vld [vmem:[%s752 + $0x8] sm:$0xff]
          %v763 = vld [vmem:[%s752 + $0x10] sm:$0xff]
          %v764 = vld [vmem:[%s752 + $0x18] sm:$0xff]
          %765 = vst [vmem:[#allocation8] sm:$0xff] %v761
          %766 = vst [vmem:[#allocation8 + $0x8] sm:$0xff] %v762
          %767 = vst [vmem:[#allocation8 + $0x10] sm:$0xff] %v763
          %768 = vst [vmem:[#allocation8 + $0x18] sm:$0xff] %v764
        $region44: #{tpu_custom_call.1} parent=27 // pred_fallthru
          _
        // Predicated region
        $region45: #{tpu_custom_call.1} parent=27 // pred_check
          %p769 = pneg %p71
        $region46: #{tpu_custom_call.1} parent=27 // pred_check_branch
          %771 = sbr.rel (%p769) target = $region48
        $region47: #{tpu_custom_call.1} parent=27 // pred_region
          %773 = vsyncadd [#allocation5], 0
          %s775 = sshll.u32 [#allocation8], 4
          %s776 = int_to_ptr.vmem [resolvable:$true] %s775
          %s777 = sshll.u32 %s2, 4
          %s778 = int_to_ptr.hbm [resolvable:$true] %s777
          %780 = dma.vmem_to_hbm [thread:$0]  %s776, 512, %s778, [#allocation5]
        $region48: #{tpu_custom_call.1} parent=27 // pred_fallthru
          _
        // Predicated region
        $region49: #{tpu_custom_call.1} parent=27 // pred_check
          %p781 = pneg %p71
        $region50: #{tpu_custom_call.1} parent=27 // pred_check_branch
          %783 = sbr.rel (%p781) target = $region52
        $region51: #{tpu_custom_call.1} parent=27 // pred_region
          %785 = dma.done [#allocation5], 512
        $region52: #{tpu_custom_call.1} parent=27 // pred_fallthru
          _
      $region28: #{tpu_custom_call.1} parent=5 // pred_fallthru
        _
      %p786 = scmp.le.s32.totalorder 2, %s11
      // Predicated region
      $region53: #{tpu_custom_call.1} parent=5 // pred_check
        %p787 = pneg %p786
      $region54: #{tpu_custom_call.1} parent=5 // pred_check_branch
        %789 = sbr.rel (%p787) target = $region56
      $region55: #{tpu_custom_call.1} parent=5 // pred_region
        %s790 = ssub.s32 %s11, 2
      $region56: #{tpu_custom_call.1} parent=5 // pred_fallthru
        _
    $region6: #{tpu_custom_call.1} parent=1 // loop_footer
      %s15 = sadd.s32 1, %s11
    $region7: #{tpu_custom_call.1} parent=1 // loop_footer_branch
      %10 = sbr.rel target = $region3
    $region8: #{tpu_custom_call.1} parent=1 // loop_exit
      _
    %791 = vsyncpa [#allocation4], 1
    %s792 = scalar_lea.sflag [#allocation4], 1
    %793 = vsyncpa %s792, 1
    %794 = vsyncpa [#allocation7], 1
    %795 = vsyncpa [#allocation5], 1
    %s796 = scalar_lea.sflag [#allocation5], 1
    %797 = vsyncpa %s796, 1

</llo_original>
